<compile_context>
chip_gen: v5e
topology: v5e:2x2
jax: 0.10.0
libtpu: 0.0.40
codegen_flags: <defaults>
</compile_context>

<pallas_src>
import jax
import jax.numpy as jnp
from jax.experimental import pallas as pl
from jax.experimental.pallas import tpu as pltpu

# Small, forward-consistent shapes
B, C, H, W = 2, 4, 16, 16   # batch, in-channels, spatial
FEAT = 64                   # stand-in for resnet.fc.in_features
EMBED = 32                  # config.embed_dim
EPS = 1e-5                  # BatchNorm1d default eps

K_RAW = 9 * C               # im2col contraction dim (3x3 taps * C channels) = 36
K = K_RAW + 4               # +1 ones column (folded conv bias) +3 pad -> 40
HW = H * W                  # im2col rows per batch image (256)
M = B * HW                  # total im2col rows (512)


def encoder_kernel(patches_ref, cw_ref, lw_ref, bn_ref, out_ref):
    # patches: (M, K)        bf16 im2col patches; column K_RAW is all-ones
    # cw:      (K, FEAT)     bf16 fused 3x3 conv weight; row K_RAW is conv bias
    # lw:      (FEAT, EMBED) f32 linear weight (pre-transposed for x @ W)
    # bn:      (2, EMBED)    f32 packed BN params: row 0 = gamma, row 1 = beta
    # out:     (B, EMBED)    f32

    cw = cw_ref[...]

    # --- stand-in backbone: im2col conv (bf16 MXU) + ReLU + global avg pool,
    #     chunked per batch image so the live activation stays at 16 vregs and
    #     the pool is a free XLU sublane reduction.
    pooled_rows = []
    for b in range(B):
        chunk = patches_ref[pl.ds(b * HW, HW), :]                  # (HW, K) bf16
        acc = jnp.dot(chunk, cw, preferred_element_type=jnp.float32)
        acc = jnp.maximum(acc, 0.0)            # conv bias already folded into K
        pooled_rows.append(jnp.mean(acc, axis=0, keepdims=True))   # (1, FEAT)
    pooled = jnp.concatenate(pooled_rows, axis=0)                  # (B, FEAT)

    # --- linear layer (bias dropped: cancels under training-mode BatchNorm) ---
    lin = jnp.dot(pooled, lw_ref[...],
                  preferred_element_type=jnp.float32)              # (B, EMBED)

    # --- BatchNorm1d (training-mode batch stats), affine folded into scale ---
    mu = jnp.mean(lin, axis=0, keepdims=True)                      # (1, EMBED)
    diff = lin - mu
    var = jnp.mean(diff * diff, axis=0, keepdims=True)             # biased var
    gamma = bn_ref[0:1, :]
    beta = bn_ref[1:2, :]
    scale = gamma * jax.lax.rsqrt(var + EPS)                       # EUP rsqrt
    out_ref[...] = diff * scale + beta                             # (B, EMBED)


def init_params():
    key = jax.random.PRNGKey(42)
    k1, k2, k3 = jax.random.split(key, 3)
    conv_w = 0.1 * jax.random.normal(k1, (9, C, FEAT), jnp.float32)
    conv_b = 0.01 * jnp.ones((1, FEAT), jnp.float32)
    lin_w = 0.05 * jax.random.normal(k2, (FEAT, EMBED), jnp.float32)
    lin_b = 0.02 * jax.random.normal(k3, (1, EMBED), jnp.float32)  # cancels in BN
    bn_gamma = jnp.ones((1, EMBED), jnp.float32)       # default BN init
    bn_beta = jnp.zeros((1, EMBED), jnp.float32)
    return conv_w, conv_b, lin_w, lin_b, bn_gamma, bn_beta


@jax.jit
def encoder_forward(x_nchw, conv_w, conv_b, lin_w, lin_b, bn_gamma, bn_beta):
    # Linear bias is a per-feature constant; it cancels exactly in
    # training-mode BatchNorm (lin - mean(lin)), so it is not even sent.
    del lin_b

    # ---- plain-JAX glue: layout + im2col over the tiny (4 KiB) raw input.
    x_nhwc = jnp.transpose(x_nchw, (0, 2, 3, 1)).astype(jnp.float32)
    x_pad = jnp.pad(x_nhwc, ((0, 0), (1, 1), (1, 1), (0, 0)))

    # im2col: tap-major concatenation along channels -> (B, H, W, 9*C)
    taps = [x_pad[:, dy:dy + H, dx:dx + W, :]
            for dy in range(3) for dx in range(3)]
    patches = jnp.concatenate(taps, axis=-1).reshape(M, K_RAW)     # (M, 36) f32
    # Fold the conv bias into the contraction (ones column) and pad K only to
    # 40 (not 128); cast the MXU operand to bf16 to halve HBM->VMEM bytes.
    patches = jnp.concatenate(
        [patches,
         jnp.ones((M, 1), jnp.float32),
         jnp.zeros((M, K - K_RAW - 1), jnp.float32)], axis=-1)
    patches = patches.astype(jnp.bfloat16)                         # (M, K) bf16

    # fused conv weight (9, C, FEAT) -> (36, FEAT), bias row appended, bf16
    cw_fused = jnp.concatenate(
        [conv_w.reshape(K_RAW, FEAT),
         conv_b,
         jnp.zeros((K - K_RAW - 1, FEAT), jnp.float32)], axis=0)
    cw_fused = cw_fused.astype(jnp.bfloat16)                       # (K, FEAT)

    # pack gamma/beta into one lane-dense array -> a single DMA
    bn_params = jnp.concatenate([bn_gamma, bn_beta], axis=0)       # (2, EMBED)

    vmem_spec = pl.BlockSpec(memory_space=pltpu.MemorySpace.VMEM)
    out = pl.pallas_call(
        encoder_kernel,
        out_shape=jax.ShapeDtypeStruct((B, EMBED), jnp.float32),
        in_specs=[vmem_spec] * 4,
        out_specs=vmem_spec,
    )(patches, cw_fused, lin_w, bn_params)
    return out


if __name__ == "__main__":
    params = init_params()
    x = jax.random.normal(jax.random.PRNGKey(0), (B, C, H, W), jnp.float32)

    out = encoder_forward(x, *params)
    jax.block_until_ready(out)

    assert out.shape == (B, EMBED), out.shape
    assert out.dtype == jnp.float32, out.dtype
    print("KERNEL_OK")
</pallas_src>

<mosaic_0001>
module attributes {stable_mosaic.version = 11 : i64} {
  func.func @encoder_kernel(%arg0: memref<512x40xbf16, #tpu.memory_space<vmem>>, %arg1: memref<40x64xbf16, #tpu.memory_space<vmem>>, %arg2: memref<64x32xf32, #tpu.memory_space<vmem>>, %arg3: memref<2x32xf32, #tpu.memory_space<vmem>>, %arg4: memref<2x32xf32, #tpu.memory_space<vmem>>) attributes {dimension_semantics = [], scalar_prefetch = 0 : i64, scratch_operands = 0 : i64, tpu.core_type = #tpu.core_type<tc>} {
    %c0 = arith.constant 0 : index
    %c0_0 = arith.constant 0 : index
    %0 = vector.load %arg1[%c0, %c0_0] : memref<40x64xbf16, #tpu.memory_space<vmem>>, vector<40x64xbf16>
    %c0_1 = arith.constant 0 : index
    %c0_2 = arith.constant 0 : index
    %1 = vector.load %arg0[%c0_1, %c0_2] : memref<512x40xbf16, #tpu.memory_space<vmem>>, vector<256x40xbf16>
    %cst = arith.constant dense<0.000000e+00> : vector<256x64xf32>
    %2 = tpu.matmul %1, %0, %cst {dimension_numbers = #tpu.dot_dimension_numbers<[1], [0], [0], [1], [0, 0, 1, 1], [], []>} : vector<256x40xbf16>, vector<40x64xbf16>, vector<256x64xf32> -> vector<256x64xf32>
    %cst_3 = arith.constant 0.000000e+00 : f32
    %3 = vector.broadcast %cst_3 : f32 to vector<256x64xf32>
    %4 = arith.maximumf %2, %3 : vector<256x64xf32>
    %cst_4 = arith.constant dense<0.000000e+00> : vector<64xf32>
    %5 = vector.multi_reduction <add>, %4, %cst_4 [0] : vector<256x64xf32> to vector<64xf32>
    %6 = vector.shape_cast %5 : vector<64xf32> to vector<1x64xf32>
    %cst_5 = arith.constant 2.560000e+02 : f32
    %7 = vector.broadcast %cst_5 : f32 to vector<1x64xf32>
    %8 = arith.divf %6, %7 : vector<1x64xf32>
    %c256 = arith.constant 256 : index
    %c0_6 = arith.constant 0 : index
    %9 = vector.load %arg0[%c256, %c0_6] : memref<512x40xbf16, #tpu.memory_space<vmem>>, vector<256x40xbf16>
    %cst_7 = arith.constant dense<0.000000e+00> : vector<256x64xf32>
    %10 = tpu.matmul %9, %0, %cst_7 {dimension_numbers = #tpu.dot_dimension_numbers<[1], [0], [0], [1], [0, 0, 1, 1], [], []>} : vector<256x40xbf16>, vector<40x64xbf16>, vector<256x64xf32> -> vector<256x64xf32>
    %cst_8 = arith.constant 0.000000e+00 : f32
    %11 = vector.broadcast %cst_8 : f32 to vector<256x64xf32>
    %12 = arith.maximumf %10, %11 : vector<256x64xf32>
    %cst_9 = arith.constant dense<0.000000e+00> : vector<64xf32>
    %13 = vector.multi_reduction <add>, %12, %cst_9 [0] : vector<256x64xf32> to vector<64xf32>
    %14 = vector.shape_cast %13 : vector<64xf32> to vector<1x64xf32>
    %cst_10 = arith.constant 2.560000e+02 : f32
    %15 = vector.broadcast %cst_10 : f32 to vector<1x64xf32>
    %16 = arith.divf %14, %15 : vector<1x64xf32>
    %17 = tpu.concatenate %8, %16 in 0 : vector<1x64xf32>, vector<1x64xf32> -> vector<2x64xf32>
    %c0_11 = arith.constant 0 : index
    %c0_12 = arith.constant 0 : index
    %18 = vector.load %arg2[%c0_11, %c0_12] : memref<64x32xf32, #tpu.memory_space<vmem>>, vector<64x32xf32>
    %cst_13 = arith.constant dense<0.000000e+00> : vector<2x32xf32>
    %19 = tpu.matmul %17, %18, %cst_13 {dimension_numbers = #tpu.dot_dimension_numbers<[1], [0], [0], [1], [0, 0, 1, 1], [], []>} : vector<2x64xf32>, vector<64x32xf32>, vector<2x32xf32> -> vector<2x32xf32>
    %cst_14 = arith.constant dense<0.000000e+00> : vector<32xf32>
    %20 = vector.multi_reduction <add>, %19, %cst_14 [0] : vector<2x32xf32> to vector<32xf32>
    %21 = vector.shape_cast %20 : vector<32xf32> to vector<1x32xf32>
    %cst_15 = arith.constant 2.000000e+00 : f32
    %22 = vector.broadcast %cst_15 : f32 to vector<1x32xf32>
    %23 = arith.divf %21, %22 : vector<1x32xf32>
    %24 = vector.broadcast %23 : vector<1x32xf32> to vector<2x32xf32>
    %25 = arith.subf %19, %24 : vector<2x32xf32>
    %26 = arith.mulf %25, %25 : vector<2x32xf32>
    %cst_16 = arith.constant dense<0.000000e+00> : vector<32xf32>
    %27 = vector.multi_reduction <add>, %26, %cst_16 [0] : vector<2x32xf32> to vector<32xf32>
    %28 = vector.shape_cast %27 : vector<32xf32> to vector<1x32xf32>
    %cst_17 = arith.constant 2.000000e+00 : f32
    %29 = vector.broadcast %cst_17 : f32 to vector<1x32xf32>
    %30 = arith.divf %28, %29 : vector<1x32xf32>
    %c0_18 = arith.constant 0 : index
    %c0_19 = arith.constant 0 : index
    %31 = vector.load %arg3[%c0_18, %c0_19] : memref<2x32xf32, #tpu.memory_space<vmem>>, vector<1x32xf32>
    %c1 = arith.constant 1 : index
    %c0_20 = arith.constant 0 : index
    %32 = vector.load %arg3[%c1, %c0_20] : memref<2x32xf32, #tpu.memory_space<vmem>>, vector<1x32xf32>
    %cst_21 = arith.constant 9.99999974E-6 : f32
    %33 = vector.broadcast %cst_21 : f32 to vector<1x32xf32>
    %34 = arith.addf %30, %33 : vector<1x32xf32>
    %35 = math.rsqrt %34 : vector<1x32xf32>
    %36 = arith.mulf %31, %35 : vector<1x32xf32>
    %37 = vector.broadcast %36 : vector<1x32xf32> to vector<2x32xf32>
    %38 = arith.mulf %25, %37 : vector<2x32xf32>
    %39 = vector.broadcast %32 : vector<1x32xf32> to vector<2x32xf32>
    %40 = arith.addf %38, %39 : vector<2x32xf32>
    %c0_22 = arith.constant 0 : index
    %c0_23 = arith.constant 0 : index
    %41 = vector.load %arg4[%c0_22, %c0_23] : memref<2x32xf32, #tpu.memory_space<vmem>>, vector<2x32xf32>
    tpu.vector_store %arg4[%c0_22, %c0_23], %40 {strides = array<i32>} : memref<2x32xf32, #tpu.memory_space<vmem>>, vector<2x32xf32>,
    return
  }
}

</mosaic_0001>

<llo_original>
// kernel: encoder_forward.1
$region0: #{encoder_forward.1}
  #allocation0 [shape = 'u32[]', space=smem, size = 0x4, offset = 0x4, fixed_abs, tag = 'smem constant byte address 0x4 - core index']
  #allocation1 [shape = 'u32[72,128]{1,0:T(1,128)}', space=vmem, size = 0x9000, scoped, tag = 'internal scratch']
  %s0 = inlined_call_operand.vmem [shape: bf16[512,40], index: 0, kind: input, shape index: {}]
  %s1 = inlined_call_operand.vmem [shape: bf16[40,64], index: 1, kind: input, shape index: {}]
  %s2 = inlined_call_operand.vmem [shape: f32[64,32], index: 2, kind: input, shape index: {}]
  %s3 = inlined_call_operand.vmem [shape: f32[2,32], index: 3, kind: input, shape index: {}]
  %s4 = inlined_call_operand.hbm [shape: f32[2,32], index: 4, kind: output, shape index: {}]
  %s5 = sld [smem:[#allocation0]]
  $region26: #{encoder_forward.1} parent=0
    _
  %s7 = ssub.s32 1, %s5
  %s8 = scalar_select 0, %s7, %s5
  $region1: #{encoder_forward.1} parent=0
    #allocation2 [shape = 'u8[1024]{0}', space=vmem, size = 0x400, scoped, tag = 'output window, operand 0, single buffered']
    #allocation3 [shape = 's32[1]{0}', space=sflag, size = 0x4, scoped, tag = 'scoped memory for encoder_forward.1']
    %9 = vsyncpa [#allocation3], 0
    // Predicated region
    $region2: #{encoder_forward.1} parent=1 // pred_check
      _
    $region3: #{encoder_forward.1} parent=1 // pred_check_branch
      %11 = sbr.rel (0) target = $region5
    $region4: #{encoder_forward.1} parent=1 // pred_region
      _
    $region5: #{encoder_forward.1} parent=1 // pred_fallthru
      _
    // Predicated region
    $region6: #{encoder_forward.1} parent=1 // pred_check
      _
    $region7: #{encoder_forward.1} parent=1 // pred_check_branch
      %13 = sbr.rel (0) target = $region9
    $region8: #{encoder_forward.1} parent=1 // pred_region
      _
    $region9: #{encoder_forward.1} parent=1 // pred_fallthru
      _
    // Predicated region
    $region10: #{encoder_forward.1} parent=1 // pred_check
      _
    $region11: #{encoder_forward.1} parent=1 // pred_check_branch
      %15 = sbr.rel (0) target = $region13
    $region12: #{encoder_forward.1} parent=1 // pred_region
      _
    $region13: #{encoder_forward.1} parent=1 // pred_fallthru
      _
    // Predicated region
    $region14: #{encoder_forward.1} parent=1 // pred_check
      _
    $region15: #{encoder_forward.1} parent=1 // pred_check_branch
      %17 = sbr.rel (0) target = $region17
    $region16: #{encoder_forward.1} parent=1 // pred_region
      _
    $region17: #{encoder_forward.1} parent=1 // pred_fallthru
      _
    %v19 = vld [vmem:[%s1] sm:$0xf]
    %v20 = vld [vmem:[%s1 + $0x4] sm:$0xf]
    %v21 = vld [vmem:[%s1 + $0x8] sm:$0xf]
    %v22 = vld [vmem:[%s1 + $0xc] sm:$0xf]
    %v23 = vld [vmem:[%s1 + $0x10] sm:$0xf]
    %v24 = vld [vmem:[%s0] sm:$0xf]
    %v25 = vld [vmem:[%s0 + $0x4] sm:$0xf]
    %v26 = vld [vmem:[%s0 + $0x8] sm:$0xf]
    %v27 = vld [vmem:[%s0 + $0xc] sm:$0xf]
    %v28 = vld [vmem:[%s0 + $0x10] sm:$0xf]
    %v29 = vld [vmem:[%s0 + $0x14] sm:$0xf]
    %v30 = vld [vmem:[%s0 + $0x18] sm:$0xf]
    %v31 = vld [vmem:[%s0 + $0x1c] sm:$0xf]
    %v32 = vld [vmem:[%s0 + $0x20] sm:$0xf]
    %v33 = vld [vmem:[%s0 + $0x24] sm:$0xf]
    %v34 = vld [vmem:[%s0 + $0x28] sm:$0xf]
    %v35 = vld [vmem:[%s0 + $0x2c] sm:$0xf]
    %v36 = vld [vmem:[%s0 + $0x30] sm:$0xf]
    %v37 = vld [vmem:[%s0 + $0x34] sm:$0xf]
    %v38 = vld [vmem:[%s0 + $0x38] sm:$0xf]
    %v39 = vld [vmem:[%s0 + $0x3c] sm:$0xf]
    %v40 = vld [vmem:[%s0 + $0x40] sm:$0xf]
    %v41 = vld [vmem:[%s0 + $0x44] sm:$0xf]
    %v42 = vld [vmem:[%s0 + $0x48] sm:$0xf]
    %v43 = vld [vmem:[%s0 + $0x4c] sm:$0xf]
    %v44 = vld [vmem:[%s0 + $0x50] sm:$0xf]
    %v45 = vld [vmem:[%s0 + $0x54] sm:$0xf]
    %v46 = vld [vmem:[%s0 + $0x58] sm:$0xf]
    %v47 = vld [vmem:[%s0 + $0x5c] sm:$0xf]
    %v48 = vld [vmem:[%s0 + $0x60] sm:$0xf]
    %v49 = vld [vmem:[%s0 + $0x64] sm:$0xf]
    %v50 = vld [vmem:[%s0 + $0x68] sm:$0xf]
    %v51 = vld [vmem:[%s0 + $0x6c] sm:$0xf]
    %v52 = vld [vmem:[%s0 + $0x70] sm:$0xf]
    %v53 = vld [vmem:[%s0 + $0x74] sm:$0xf]
    %v54 = vld [vmem:[%s0 + $0x78] sm:$0xf]
    %v55 = vld [vmem:[%s0 + $0x7c] sm:$0xf]
    %v88 = vunpack.c.l.b16 %v24
    %v89 = vunpack.c.l.b16 %v25
    %v90 = vunpack.c.l.b16 %v26
    %v91 = vunpack.c.l.b16 %v27
    %v92 = vunpack.c.l.b16 %v28
    %v93 = vunpack.c.l.b16 %v29
    %v94 = vunpack.c.l.b16 %v30
    %v95 = vunpack.c.l.b16 %v31
    %v96 = vunpack.c.l.b16 %v32
    %v97 = vunpack.c.l.b16 %v33
    %v98 = vunpack.c.l.b16 %v34
    %v99 = vunpack.c.l.b16 %v35
    %v100 = vunpack.c.l.b16 %v36
    %v101 = vunpack.c.l.b16 %v37
    %v102 = vunpack.c.l.b16 %v38
    %v103 = vunpack.c.l.b16 %v39
    %v104 = vunpack.c.l.b16 %v40
    %v105 = vunpack.c.l.b16 %v41
    %v106 = vunpack.c.l.b16 %v42
    %v107 = vunpack.c.l.b16 %v43
    %v108 = vunpack.c.l.b16 %v44
    %v109 = vunpack.c.l.b16 %v45
    %v110 = vunpack.c.l.b16 %v46
    %v111 = vunpack.c.l.b16 %v47
    %v112 = vunpack.c.l.b16 %v48
    %v113 = vunpack.c.l.b16 %v49
    %v114 = vunpack.c.l.b16 %v50
    %v115 = vunpack.c.l.b16 %v51
    %v116 = vunpack.c.l.b16 %v52
    %v117 = vunpack.c.l.b16 %v53
    %v118 = vunpack.c.l.b16 %v54
    %v119 = vunpack.c.l.b16 %v55
    %v120 = vpack.c.b16 %v89, %v88
    %v121 = vpack.c.b16 %v91, %v90
    %v122 = vpack.c.b16 %v93, %v92
    %v123 = vpack.c.b16 %v95, %v94
    %v124 = vpack.c.b16 %v97, %v96
    %v125 = vpack.c.b16 %v99, %v98
    %v126 = vpack.c.b16 %v101, %v100
    %v127 = vpack.c.b16 %v103, %v102
    %v128 = vpack.c.b16 %v105, %v104
    %v129 = vpack.c.b16 %v107, %v106
    %v130 = vpack.c.b16 %v109, %v108
    %v131 = vpack.c.b16 %v111, %v110
    %v132 = vpack.c.b16 %v113, %v112
    %v133 = vpack.c.b16 %v115, %v114
    %v134 = vpack.c.b16 %v117, %v116
    %v135 = vpack.c.b16 %v119, %v118
    %v141 = vunpack.c.l.b16 %v19
    %v142 = vunpack.c.l.b16 %v20
    %v143 = vunpack.c.l.b16 %v21
    %v144 = vunpack.c.l.b16 %v22
    %v145 = vunpack.c.l.b16 %v23
    %v146 = vpack.c.b16 %v142, %v141
    %v147 = vpack.c.b16 %v144, %v143
    %v148 = vpack.c.b16 %v145, %v145
    %vm151 = vcmask 326656
    %v153 = vsel %vm151, %v120, 0
    %v156 = vsel %vm151, %v121, 0
    %v159 = vsel %vm151, %v122, 0
    %v162 = vsel %vm151, %v123, 0
    %v165 = vsel %vm151, %v124, 0
    %v168 = vsel %vm151, %v125, 0
    %v171 = vsel %vm151, %v126, 0
    %v174 = vsel %vm151, %v127, 0
    %v177 = vsel %vm151, %v128, 0
    %v180 = vsel %vm151, %v129, 0
    %v183 = vsel %vm151, %v130, 0
    %v186 = vsel %vm151, %v131, 0
    %v189 = vsel %vm151, %v132, 0
    %v192 = vsel %vm151, %v133, 0
    %v195 = vsel %vm151, %v134, 0
    %v198 = vsel %vm151, %v135, 0
    %vm200 = vcmask 1043456
    %v202 = vsel %vm200, %v148, 0
    %204 = vmatpush.bf16.msra.mxu0 0
    %205 = vmatpush.bf16.msra.mxu0 0
    %206 = vmatpush.bf16.msra.mxu0 0
    %207 = vmatpush.bf16.msra.mxu0 0
    %208 = vmatpush.bf16.msra.mxu0 0
    %209 = vmatpush.bf16.msra.mxu0 %v202
    %210 = vmatpush.bf16.msra.mxu0 %v147
    %211 = vmatpush.bf16.msra.mxu0 %v146
    %212 = vmatmul.bf16.gmra.mxu0 %v153
    %v213 = vpop.f32.mrf.mxu0
    %v214 = vadd.f32 0.0, %v213
    %v215 = vpop.f32.mrf.mxu0
    %v216 = vadd.f32 0.0, %v215
    %217 = vmatmul.bf16.gmra.mxu0 %v156
    %v218 = vpop.f32.mrf.mxu0
    %v219 = vadd.f32 0.0, %v218
    %v220 = vpop.f32.mrf.mxu0
    %v221 = vadd.f32 0.0, %v220
    %222 = vmatmul.bf16.gmra.mxu0 %v159
    %v223 = vpop.f32.mrf.mxu0
    %v224 = vadd.f32 0.0, %v223
    %v225 = vpop.f32.mrf.mxu0
    %v226 = vadd.f32 0.0, %v225
    %227 = vmatmul.bf16.gmra.mxu0 %v162
    %v228 = vpop.f32.mrf.mxu0
    %v229 = vadd.f32 0.0, %v228
    %v230 = vpop.f32.mrf.mxu0
    %v231 = vadd.f32 0.0, %v230
    %232 = vmatmul.bf16.gmra.mxu0 %v165
    %v233 = vpop.f32.mrf.mxu0
    %v234 = vadd.f32 0.0, %v233
    %v235 = vpop.f32.mrf.mxu0
    %v236 = vadd.f32 0.0, %v235
    %237 = vmatmul.bf16.gmra.mxu0 %v168
    %v238 = vpop.f32.mrf.mxu0
    %v239 = vadd.f32 0.0, %v238
    %v240 = vpop.f32.mrf.mxu0
    %v241 = vadd.f32 0.0, %v240
    %242 = vmatmul.bf16.gmra.mxu0 %v171
    %v243 = vpop.f32.mrf.mxu0
    %v244 = vadd.f32 0.0, %v243
    %v245 = vpop.f32.mrf.mxu0
    %v246 = vadd.f32 0.0, %v245
    %247 = vmatmul.bf16.gmra.mxu0 %v174
    %v248 = vpop.f32.mrf.mxu0
    %v249 = vadd.f32 0.0, %v248
    %v250 = vpop.f32.mrf.mxu0
    %v251 = vadd.f32 0.0, %v250
    %252 = vmatmul.bf16.gmra.mxu0 %v177
    %v253 = vpop.f32.mrf.mxu0
    %v254 = vadd.f32 0.0, %v253
    %v255 = vpop.f32.mrf.mxu0
    %v256 = vadd.f32 0.0, %v255
    %257 = vmatmul.bf16.gmra.mxu0 %v180
    %v258 = vpop.f32.mrf.mxu0
    %v259 = vadd.f32 0.0, %v258
    %v260 = vpop.f32.mrf.mxu0
    %v261 = vadd.f32 0.0, %v260
    %262 = vmatmul.bf16.gmra.mxu0 %v183
    %v263 = vpop.f32.mrf.mxu0
    %v264 = vadd.f32 0.0, %v263
    %v265 = vpop.f32.mrf.mxu0
    %v266 = vadd.f32 0.0, %v265
    %267 = vmatmul.bf16.gmra.mxu0 %v186
    %v268 = vpop.f32.mrf.mxu0
    %v269 = vadd.f32 0.0, %v268
    %v270 = vpop.f32.mrf.mxu0
    %v271 = vadd.f32 0.0, %v270
    %272 = vmatmul.bf16.gmra.mxu0 %v189
    %v273 = vpop.f32.mrf.mxu0
    %v274 = vadd.f32 0.0, %v273
    %v275 = vpop.f32.mrf.mxu0
    %v276 = vadd.f32 0.0, %v275
    %277 = vmatmul.bf16.gmra.mxu0 %v192
    %v278 = vpop.f32.mrf.mxu0
    %v279 = vadd.f32 0.0, %v278
    %v280 = vpop.f32.mrf.mxu0
    %v281 = vadd.f32 0.0, %v280
    %282 = vmatmul.bf16.gmra.mxu0 %v195
    %v283 = vpop.f32.mrf.mxu0
    %v284 = vadd.f32 0.0, %v283
    %v285 = vpop.f32.mrf.mxu0
    %v286 = vadd.f32 0.0, %v285
    %287 = vmatmul.bf16.gmra.mxu0 %v198
    %v288 = vpop.f32.mrf.mxu0
    %v289 = vadd.f32 0.0, %v288
    %v290 = vpop.f32.mrf.mxu0
    %v291 = vadd.f32 0.0, %v290
    %292 = vdwg.mxu0
    %v293 = vmax.f32 %v214, 0.0
    %v294 = vmax.f32 %v216, 0.0
    %v295 = vmax.f32 %v219, 0.0
    %v296 = vmax.f32 %v221, 0.0
    %v297 = vmax.f32 %v224, 0.0
    %v298 = vmax.f32 %v226, 0.0
    %v299 = vmax.f32 %v229, 0.0
    %v300 = vmax.f32 %v231, 0.0
    %v301 = vmax.f32 %v234, 0.0
    %v302 = vmax.f32 %v236, 0.0
    %v303 = vmax.f32 %v239, 0.0
    %v304 = vmax.f32 %v241, 0.0
    %v305 = vmax.f32 %v244, 0.0
    %v306 = vmax.f32 %v246, 0.0
    %v307 = vmax.f32 %v249, 0.0
    %v308 = vmax.f32 %v251, 0.0
    %v309 = vmax.f32 %v254, 0.0
    %v310 = vmax.f32 %v256, 0.0
    %v311 = vmax.f32 %v259, 0.0
    %v312 = vmax.f32 %v261, 0.0
    %v313 = vmax.f32 %v264, 0.0
    %v314 = vmax.f32 %v266, 0.0
    %v315 = vmax.f32 %v269, 0.0
    %v316 = vmax.f32 %v271, 0.0
    %v317 = vmax.f32 %v274, 0.0
    %v318 = vmax.f32 %v276, 0.0
    %v319 = vmax.f32 %v279, 0.0
    %v320 = vmax.f32 %v281, 0.0
    %v321 = vmax.f32 %v284, 0.0
    %v322 = vmax.f32 %v286, 0.0
    %v323 = vmax.f32 %v289, 0.0
    %v324 = vmax.f32 %v291, 0.0
    %vm325 = vcmask 523264
    %v326 = vsel %vm325, %v293, 0.0
    %v327 = vsel %vm325, %v294, 0.0
    %v328 = vadd.f32 %v326, %v327
    %v329 = vsel %vm325, %v295, 0.0
    %v330 = vadd.f32 %v328, %v329
    %v331 = vsel %vm325, %v296, 0.0
    %v332 = vadd.f32 %v330, %v331
    %v333 = vsel %vm325, %v297, 0.0
    %v334 = vadd.f32 %v332, %v333
    %v335 = vsel %vm325, %v298, 0.0
    %v336 = vadd.f32 %v334, %v335
    %v337 = vsel %vm325, %v299, 0.0
    %v338 = vadd.f32 %v336, %v337
    %v339 = vsel %vm325, %v300, 0.0
    %v340 = vadd.f32 %v338, %v339
    %v341 = vsel %vm325, %v301, 0.0
    %v342 = vadd.f32 %v340, %v341
    %v343 = vsel %vm325, %v302, 0.0
    %v344 = vadd.f32 %v342, %v343
    %v345 = vsel %vm325, %v303, 0.0
    %v346 = vadd.f32 %v344, %v345
    %v347 = vsel %vm325, %v304, 0.0
    %v348 = vadd.f32 %v346, %v347
    %v349 = vsel %vm325, %v305, 0.0
    %v350 = vadd.f32 %v348, %v349
    %v351 = vsel %vm325, %v306, 0.0
    %v352 = vadd.f32 %v350, %v351
    %v353 = vsel %vm325, %v307, 0.0
    %v354 = vadd.f32 %v352, %v353
    %v355 = vsel %vm325, %v308, 0.0
    %v356 = vadd.f32 %v354, %v355
    %v357 = vsel %vm325, %v309, 0.0
    %v358 = vadd.f32 %v356, %v357
    %v359 = vsel %vm325, %v310, 0.0
    %v360 = vadd.f32 %v358, %v359
    %v361 = vsel %vm325, %v311, 0.0
    %v362 = vadd.f32 %v360, %v361
    %v363 = vsel %vm325, %v312, 0.0
    %v364 = vadd.f32 %v362, %v363
    %v365 = vsel %vm325, %v313, 0.0
    %v366 = vadd.f32 %v364, %v365
    %v367 = vsel %vm325, %v314, 0.0
    %v368 = vadd.f32 %v366, %v367
    %v369 = vsel %vm325, %v315, 0.0
    %v370 = vadd.f32 %v368, %v369
    %v371 = vsel %vm325, %v316, 0.0
    %v372 = vadd.f32 %v370, %v371
    %v373 = vsel %vm325, %v317, 0.0
    %v374 = vadd.f32 %v372, %v373
    %v375 = vsel %vm325, %v318, 0.0
    %v376 = vadd.f32 %v374, %v375
    %v377 = vsel %vm325, %v319, 0.0
    %v378 = vadd.f32 %v376, %v377
    %v379 = vsel %vm325, %v320, 0.0
    %v380 = vadd.f32 %v378, %v379
    %v381 = vsel %vm325, %v321, 0.0
    %v382 = vadd.f32 %v380, %v381
    %v383 = vsel %vm325, %v322, 0.0
    %v384 = vadd.f32 %v382, %v383
    %v385 = vsel %vm325, %v323, 0.0
    %v386 = vadd.f32 %v384, %v385
    %v387 = vsel %vm325, %v324, 0.0
    %v388 = vadd.f32 %v386, %v387
    %v389 = vrot.slane %v388, 4
    %v390 = vadd.f32 %v388, %v389
    %v391 = vrot.slane %v390, 2
    %v392 = vadd.f32 %v390, %v391
    %v393 = vrot.slane %v392, 1
    %v394 = vadd.f32 %v392, %v393
    %v395 = vrcp.pop 256.0
    %v396 = vmul.f32 256.0, %v395
    %v397 = vsub.f32 1.0, %v396
    %v398 = vmul.f32 %v395, %v397
    %v399 = vadd.f32 %v395, %v398
    %vm400 = vweird.f32 %v395
    %v401 = vsel %vm400, %v395, %v399
    %v402 = vmul.f32 %v394, %v401
    %v403 = vld [vmem:[%s0 + $0x80] sm:$0xf]
    %v404 = vld [vmem:[%s0 + $0x84] sm:$0xf]
    %v405 = vld [vmem:[%s0 + $0x88] sm:$0xf]
    %v406 = vld [vmem:[%s0 + $0x8c] sm:$0xf]
    %v407 = vld [vmem:[%s0 + $0x90] sm:$0xf]
    %v408 = vld [vmem:[%s0 + $0x94] sm:$0xf]
    %v409 = vld [vmem:[%s0 + $0x98] sm:$0xf]
    %v410 = vld [vmem:[%s0 + $0x9c] sm:$0xf]
    %v411 = vld [vmem:[%s0 + $0xa0] sm:$0xf]
    %v412 = vld [vmem:[%s0 + $0xa4] sm:$0xf]
    %v413 = vld [vmem:[%s0 + $0xa8] sm:$0xf]
    %v414 = vld [vmem:[%s0 + $0xac] sm:$0xf]
    %v415 = vld [vmem:[%s0 + $0xb0] sm:$0xf]
    %v416 = vld [vmem:[%s0 + $0xb4] sm:$0xf]
    %v417 = vld [vmem:[%s0 + $0xb8] sm:$0xf]
    %v418 = vld [vmem:[%s0 + $0xbc] sm:$0xf]
    %v419 = vld [vmem:[%s0 + $0xc0] sm:$0xf]
    %v420 = vld [vmem:[%s0 + $0xc4] sm:$0xf]
    %v421 = vld [vmem:[%s0 + $0xc8] sm:$0xf]
    %v422 = vld [vmem:[%s0 + $0xcc] sm:$0xf]
    %v423 = vld [vmem:[%s0 + $0xd0] sm:$0xf]
    %v424 = vld [vmem:[%s0 + $0xd4] sm:$0xf]
    %v425 = vld [vmem:[%s0 + $0xd8] sm:$0xf]
    %v426 = vld [vmem:[%s0 + $0xdc] sm:$0xf]
    %v427 = vld [vmem:[%s0 + $0xe0] sm:$0xf]
    %v428 = vld [vmem:[%s0 + $0xe4] sm:$0xf]
    %v429 = vld [vmem:[%s0 + $0xe8] sm:$0xf]
    %v430 = vld [vmem:[%s0 + $0xec] sm:$0xf]
    %v431 = vld [vmem:[%s0 + $0xf0] sm:$0xf]
    %v432 = vld [vmem:[%s0 + $0xf4] sm:$0xf]
    %v433 = vld [vmem:[%s0 + $0xf8] sm:$0xf]
    %v434 = vld [vmem:[%s0 + $0xfc] sm:$0xf]
    %v467 = vunpack.c.l.b16 %v403
    %v468 = vunpack.c.l.b16 %v404
    %v469 = vunpack.c.l.b16 %v405
    %v470 = vunpack.c.l.b16 %v406
    %v471 = vunpack.c.l.b16 %v407
    %v472 = vunpack.c.l.b16 %v408
    %v473 = vunpack.c.l.b16 %v409
    %v474 = vunpack.c.l.b16 %v410
    %v475 = vunpack.c.l.b16 %v411
    %v476 = vunpack.c.l.b16 %v412
    %v477 = vunpack.c.l.b16 %v413
    %v478 = vunpack.c.l.b16 %v414
    %v479 = vunpack.c.l.b16 %v415
    %v480 = vunpack.c.l.b16 %v416
    %v481 = vunpack.c.l.b16 %v417
    %v482 = vunpack.c.l.b16 %v418
    %v483 = vunpack.c.l.b16 %v419
    %v484 = vunpack.c.l.b16 %v420
    %v485 = vunpack.c.l.b16 %v421
    %v486 = vunpack.c.l.b16 %v422
    %v487 = vunpack.c.l.b16 %v423
    %v488 = vunpack.c.l.b16 %v424
    %v489 = vunpack.c.l.b16 %v425
    %v490 = vunpack.c.l.b16 %v426
    %v491 = vunpack.c.l.b16 %v427
    %v492 = vunpack.c.l.b16 %v428
    %v493 = vunpack.c.l.b16 %v429
    %v494 = vunpack.c.l.b16 %v430
    %v495 = vunpack.c.l.b16 %v431
    %v496 = vunpack.c.l.b16 %v432
    %v497 = vunpack.c.l.b16 %v433
    %v498 = vunpack.c.l.b16 %v434
    %v499 = vpack.c.b16 %v468, %v467
    %v500 = vpack.c.b16 %v470, %v469
    %v501 = vpack.c.b16 %v472, %v471
    %v502 = vpack.c.b16 %v474, %v473
    %v503 = vpack.c.b16 %v476, %v475
    %v504 = vpack.c.b16 %v478, %v477
    %v505 = vpack.c.b16 %v480, %v479
    %v506 = vpack.c.b16 %v482, %v481
    %v507 = vpack.c.b16 %v484, %v483
    %v508 = vpack.c.b16 %v486, %v485
    %v509 = vpack.c.b16 %v488, %v487
    %v510 = vpack.c.b16 %v490, %v489
    %v511 = vpack.c.b16 %v492, %v491
    %v512 = vpack.c.b16 %v494, %v493
    %v513 = vpack.c.b16 %v496, %v495
    %v514 = vpack.c.b16 %v498, %v497
    %v516 = vsel %vm151, %v499, 0
    %v519 = vsel %vm151, %v500, 0
    %v522 = vsel %vm151, %v501, 0
    %v525 = vsel %vm151, %v502, 0
    %v528 = vsel %vm151, %v503, 0
    %v531 = vsel %vm151, %v504, 0
    %v534 = vsel %vm151, %v505, 0
    %v537 = vsel %vm151, %v506, 0
    %v540 = vsel %vm151, %v507, 0
    %v543 = vsel %vm151, %v508, 0
    %v546 = vsel %vm151, %v509, 0
    %v549 = vsel %vm151, %v510, 0
    %v552 = vsel %vm151, %v511, 0
    %v555 = vsel %vm151, %v512, 0
    %v558 = vsel %vm151, %v513, 0
    %v561 = vsel %vm151, %v514, 0
    %563 = vmatpush.bf16.msra.mxu0 0
    %564 = vmatpush.bf16.msra.mxu0 0
    %565 = vmatpush.bf16.msra.mxu0 0
    %566 = vmatpush.bf16.msra.mxu0 0
    %567 = vmatpush.bf16.msra.mxu0 0
    %568 = vmatpush.bf16.msra.mxu0 %v202
    %569 = vmatpush.bf16.msra.mxu0 %v147
    %570 = vmatpush.bf16.msra.mxu0 %v146
    %571 = vmatmul.bf16.gmra.mxu0 %v516
    %v572 = vpop.f32.mrf.mxu0
    %v573 = vadd.f32 0.0, %v572
    %v574 = vpop.f32.mrf.mxu0
    %v575 = vadd.f32 0.0, %v574
    %576 = vmatmul.bf16.gmra.mxu0 %v519
    %v577 = vpop.f32.mrf.mxu0
    %v578 = vadd.f32 0.0, %v577
    %v579 = vpop.f32.mrf.mxu0
    %v580 = vadd.f32 0.0, %v579
    %581 = vmatmul.bf16.gmra.mxu0 %v522
    %v582 = vpop.f32.mrf.mxu0
    %v583 = vadd.f32 0.0, %v582
    %v584 = vpop.f32.mrf.mxu0
    %v585 = vadd.f32 0.0, %v584
    %586 = vmatmul.bf16.gmra.mxu0 %v525
    %v587 = vpop.f32.mrf.mxu0
    %v588 = vadd.f32 0.0, %v587
    %v589 = vpop.f32.mrf.mxu0
    %v590 = vadd.f32 0.0, %v589
    %591 = vmatmul.bf16.gmra.mxu0 %v528
    %v592 = vpop.f32.mrf.mxu0
    %v593 = vadd.f32 0.0, %v592
    %v594 = vpop.f32.mrf.mxu0
    %v595 = vadd.f32 0.0, %v594
    %596 = vmatmul.bf16.gmra.mxu0 %v531
    %v597 = vpop.f32.mrf.mxu0
    %v598 = vadd.f32 0.0, %v597
    %v599 = vpop.f32.mrf.mxu0
    %v600 = vadd.f32 0.0, %v599
    %601 = vmatmul.bf16.gmra.mxu0 %v534
    %v602 = vpop.f32.mrf.mxu0
    %v603 = vadd.f32 0.0, %v602
    %v604 = vpop.f32.mrf.mxu0
    %v605 = vadd.f32 0.0, %v604
    %606 = vmatmul.bf16.gmra.mxu0 %v537
    %v607 = vpop.f32.mrf.mxu0
    %v608 = vadd.f32 0.0, %v607
    %v609 = vpop.f32.mrf.mxu0
    %v610 = vadd.f32 0.0, %v609
    %611 = vmatmul.bf16.gmra.mxu0 %v540
    %v612 = vpop.f32.mrf.mxu0
    %v613 = vadd.f32 0.0, %v612
    %v614 = vpop.f32.mrf.mxu0
    %v615 = vadd.f32 0.0, %v614
    %616 = vmatmul.bf16.gmra.mxu0 %v543
    %v617 = vpop.f32.mrf.mxu0
    %v618 = vadd.f32 0.0, %v617
    %v619 = vpop.f32.mrf.mxu0
    %v620 = vadd.f32 0.0, %v619
    %621 = vmatmul.bf16.gmra.mxu0 %v546
    %v622 = vpop.f32.mrf.mxu0
    %v623 = vadd.f32 0.0, %v622
    %v624 = vpop.f32.mrf.mxu0
    %v625 = vadd.f32 0.0, %v624
    %626 = vmatmul.bf16.gmra.mxu0 %v549
    %v627 = vpop.f32.mrf.mxu0
    %v628 = vadd.f32 0.0, %v627
    %v629 = vpop.f32.mrf.mxu0
    %v630 = vadd.f32 0.0, %v629
    %631 = vmatmul.bf16.gmra.mxu0 %v552
    %v632 = vpop.f32.mrf.mxu0
    %v633 = vadd.f32 0.0, %v632
    %v634 = vpop.f32.mrf.mxu0
    %v635 = vadd.f32 0.0, %v634
    %636 = vmatmul.bf16.gmra.mxu0 %v555
    %v637 = vpop.f32.mrf.mxu0
    %v638 = vadd.f32 0.0, %v637
    %v639 = vpop.f32.mrf.mxu0
    %v640 = vadd.f32 0.0, %v639
    %641 = vmatmul.bf16.gmra.mxu0 %v558
    %v642 = vpop.f32.mrf.mxu0
    %v643 = vadd.f32 0.0, %v642
    %v644 = vpop.f32.mrf.mxu0
    %v645 = vadd.f32 0.0, %v644
    %646 = vmatmul.bf16.gmra.mxu0 %v561
    %v647 = vpop.f32.mrf.mxu0
    %v648 = vadd.f32 0.0, %v647
    %v649 = vpop.f32.mrf.mxu0
    %v650 = vadd.f32 0.0, %v649
    %651 = vdwg.mxu0
    %v652 = vmax.f32 %v573, 0.0
    %v653 = vmax.f32 %v575, 0.0
    %v654 = vmax.f32 %v578, 0.0
    %v655 = vmax.f32 %v580, 0.0
    %v656 = vmax.f32 %v583, 0.0
    %v657 = vmax.f32 %v585, 0.0
    %v658 = vmax.f32 %v588, 0.0
    %v659 = vmax.f32 %v590, 0.0
    %v660 = vmax.f32 %v593, 0.0
    %v661 = vmax.f32 %v595, 0.0
    %v662 = vmax.f32 %v598, 0.0
    %v663 = vmax.f32 %v600, 0.0
    %v664 = vmax.f32 %v603, 0.0
    %v665 = vmax.f32 %v605, 0.0
    %v666 = vmax.f32 %v608, 0.0
    %v667 = vmax.f32 %v610, 0.0
    %v668 = vmax.f32 %v613, 0.0
    %v669 = vmax.f32 %v615, 0.0
    %v670 = vmax.f32 %v618, 0.0
    %v671 = vmax.f32 %v620, 0.0
    %v672 = vmax.f32 %v623, 0.0
    %v673 = vmax.f32 %v625, 0.0
    %v674 = vmax.f32 %v628, 0.0
    %v675 = vmax.f32 %v630, 0.0
    %v676 = vmax.f32 %v633, 0.0
    %v677 = vmax.f32 %v635, 0.0
    %v678 = vmax.f32 %v638, 0.0
    %v679 = vmax.f32 %v640, 0.0
    %v680 = vmax.f32 %v643, 0.0
    %v681 = vmax.f32 %v645, 0.0
    %v682 = vmax.f32 %v648, 0.0
    %v683 = vmax.f32 %v650, 0.0
    %v684 = vsel %vm325, %v652, 0.0
    %v685 = vsel %vm325, %v653, 0.0
    %v686 = vadd.f32 %v684, %v685
    %v687 = vsel %vm325, %v654, 0.0
    %v688 = vadd.f32 %v686, %v687
    %v689 = vsel %vm325, %v655, 0.0
    %v690 = vadd.f32 %v688, %v689
    %v691 = vsel %vm325, %v656, 0.0
    %v692 = vadd.f32 %v690, %v691
    %v693 = vsel %vm325, %v657, 0.0
    %v694 = vadd.f32 %v692, %v693
    %v695 = vsel %vm325, %v658, 0.0
    %v696 = vadd.f32 %v694, %v695
    %v697 = vsel %vm325, %v659, 0.0
    %v698 = vadd.f32 %v696, %v697
    %v699 = vsel %vm325, %v660, 0.0
    %v700 = vadd.f32 %v698, %v699
    %v701 = vsel %vm325, %v661, 0.0
    %v702 = vadd.f32 %v700, %v701
    %v703 = vsel %vm325, %v662, 0.0
    %v704 = vadd.f32 %v702, %v703
    %v705 = vsel %vm325, %v663, 0.0
    %v706 = vadd.f32 %v704, %v705
    %v707 = vsel %vm325, %v664, 0.0
    %v708 = vadd.f32 %v706, %v707
    %v709 = vsel %vm325, %v665, 0.0
    %v710 = vadd.f32 %v708, %v709
    %v711 = vsel %vm325, %v666, 0.0
    %v712 = vadd.f32 %v710, %v711
    %v713 = vsel %vm325, %v667, 0.0
    %v714 = vadd.f32 %v712, %v713
    %v715 = vsel %vm325, %v668, 0.0
    %v716 = vadd.f32 %v714, %v715
    %v717 = vsel %vm325, %v669, 0.0
    %v718 = vadd.f32 %v716, %v717
    %v719 = vsel %vm325, %v670, 0.0
    %v720 = vadd.f32 %v718, %v719
    %v721 = vsel %vm325, %v671, 0.0
    %v722 = vadd.f32 %v720, %v721
    %v723 = vsel %vm325, %v672, 0.0
    %v724 = vadd.f32 %v722, %v723
    %v725 = vsel %vm325, %v673, 0.0
    %v726 = vadd.f32 %v724, %v725
    %v727 = vsel %vm325, %v674, 0.0
    %v728 = vadd.f32 %v726, %v727
    %v729 = vsel %vm325, %v675, 0.0
    %v730 = vadd.f32 %v728, %v729
    %v731 = vsel %vm325, %v676, 0.0
    %v732 = vadd.f32 %v730, %v731
    %v733 = vsel %vm325, %v677, 0.0
    %v734 = vadd.f32 %v732, %v733
    %v735 = vsel %vm325, %v678, 0.0
    %v736 = vadd.f32 %v734, %v735
    %v737 = vsel %vm325, %v679, 0.0
    %v738 = vadd.f32 %v736, %v737
    %v739 = vsel %vm325, %v680, 0.0
    %v740 = vadd.f32 %v738, %v739
    %v741 = vsel %vm325, %v681, 0.0
    %v742 = vadd.f32 %v740, %v741
    %v743 = vsel %vm325, %v682, 0.0
    %v744 = vadd.f32 %v742, %v743
    %v745 = vsel %vm325, %v683, 0.0
    %v746 = vadd.f32 %v744, %v745
    %v747 = vrot.slane %v746, 4
    %v748 = vadd.f32 %v746, %v747
    %v749 = vrot.slane %v748, 2
    %v750 = vadd.f32 %v748, %v749
    %v751 = vrot.slane %v750, 1
    %v752 = vadd.f32 %v750, %v751
    %v753 = vmul.f32 %v752, %v401
    %vm754 = vcmask 1040384
    %v755 = vsel %vm754, %v402, %v753
    %v756 = vld [vmem:[%s2] sm:$0xff]
    %v757 = vld [vmem:[%s2 + $0x8] sm:$0xff]
    %v758 = vld [vmem:[%s2 + $0x10] sm:$0xff]
    %v759 = vld [vmem:[%s2 + $0x18] sm:$0xff]
    %v760 = vld [vmem:[%s2 + $0x20] sm:$0xff]
    %v761 = vld [vmem:[%s2 + $0x28] sm:$0xff]
    %v762 = vld [vmem:[%s2 + $0x30] sm:$0xff]
    %v763 = vld [vmem:[%s2 + $0x38] sm:$0xff]
    %v765 = vsel %vm325, %v755, 0
    %767 = vmatpush.msra.mxu0 0.0
    %768 = vmatpush.msra.mxu0 0.0
    %769 = vmatpush.msra.mxu0 0.0
    %770 = vmatpush.msra.mxu0 0.0
    %771 = vmatpush.msra.mxu0 0.0
    %772 = vmatpush.msra.mxu0 0.0
    %773 = vmatpush.msra.mxu0 0.0
    %774 = vmatpush.msra.mxu0 0.0
    %775 = vmatpush.msra.mxu0 %v763
    %776 = vmatpush.msra.mxu0 %v762
    %777 = vmatpush.msra.mxu0 %v761
    %778 = vmatpush.msra.mxu0 %v760
    %779 = vmatpush.msra.mxu0 %v759
    %780 = vmatpush.msra.mxu0 %v758
    %781 = vmatpush.msra.mxu0 %v757
    %782 = vmatpush.msra.mxu0 %v756
    %783 = vmatmul.f32.gmra.mxu0 %v765
    %v784 = vpop.f32.mrf.mxu0
    %v785 = vadd.f32 0.0, %v784
    %786 = vdwg.mxu0
    %vm787 = vcmask 254976
    %v788 = vsel %vm787, %v785, 0.0
    %v789 = vrot.slane %v788, 4
    %v790 = vadd.f32 %v788, %v789
    %v791 = vrot.slane %v790, 2
    %v792 = vadd.f32 %v790, %v791
    %v793 = vrot.slane %v792, 1
    %v794 = vadd.f32 %v792, %v793
    %v795 = vrcp.pop 2.0
    %v796 = vmul.f32 2.0, %v795
    %v797 = vsub.f32 1.0, %v796
    %v798 = vmul.f32 %v795, %v797
    %v799 = vadd.f32 %v795, %v798
    %vm800 = vweird.f32 %v795
    %v801 = vsel %vm800, %v795, %v799
    %v802 = vmul.f32 %v794, %v801
    %v803 = vsub.f32 %v785, %v802
    %v804 = vmul.f32 %v803, %v803
    %v805 = vsel %vm787, %v804, 0.0
    %v806 = vrot.slane %v805, 4
    %v807 = vadd.f32 %v805, %v806
    %v808 = vrot.slane %v807, 2
    %v809 = vadd.f32 %v807, %v808
    %v810 = vrot.slane %v809, 1
    %v811 = vadd.f32 %v809, %v810
    %v812 = vmul.f32 %v811, %v801
    %v813 = vld [vmem:[%s3] sm:$0x1]
    %v814 = vld [vmem:[%s3 + $0x1] sm:$0x1]
    %v815 = vadd.f32 %v812, 1e-05
    %v816 = vrsqrt.pop %v815
    %v817 = vmul.f32 %v816, %v815
    %v818 = vmul.f32 %v817, %v816
    %v819 = vmul.f32 0.5, %v818
    %v820 = vsub.f32 1.5, %v819
    %v821 = vmul.f32 %v816, %v820
    %vm822 = vweird.f32 %v815
    %vm823 = vweird.f32 %v816
    %vm824 = vmor %vm822, %vm823
    %v825 = vsel %vm824, %v816, %v821
    %v826 = vmul.f32 %v813, %v825
    %v827 = vperm.slane %v826, 0
    %v828 = vmul.f32 %v803, %v827
    %v829 = vperm.slane %v814, 0
    %v830 = vadd.f32 %v828, %v829
    %831 = vst.msk [vmem:[#allocation2] sm:$0x3] %vm787, %v830
    // Predicated region
    $region18: #{encoder_forward.1} parent=1 // pred_check
      _
    $region19: #{encoder_forward.1} parent=1 // pred_check_branch
      %833 = sbr.rel (0) target = $region21
    $region20: #{encoder_forward.1} parent=1 // pred_region
      %835 = vsyncadd [#allocation3], 0
      %s837 = sshll.u32 [#allocation2], 4
      %s838 = int_to_ptr.vmem [resolvable:$true] %s837
      %s839 = sshll.u32 %s4, 4
      %s840 = int_to_ptr.hbm [resolvable:$true] %s839
      %842 = dma.vmem_to_hbm [thread:$0]  %s838, 32, %s840, [#allocation3]
    $region21: #{encoder_forward.1} parent=1 // pred_fallthru
      _
    // Predicated region
    $region22: #{encoder_forward.1} parent=1 // pred_check
      _
    $region23: #{encoder_forward.1} parent=1 // pred_check_branch
      %844 = sbr.rel (0) target = $region25
    $region24: #{encoder_forward.1} parent=1 // pred_region
      %846 = dma.done [#allocation3], 32
    $region25: #{encoder_forward.1} parent=1 // pred_fallthru
      _
    %847 = vsyncpa [#allocation3], 1

</llo_original>
